<compile_context>
chip_gen: v7x
topology: tpu7x:2x2x1
jax: 0.10.0
libtpu: 0.0.40
codegen_flags: <defaults>
</compile_context>

<pallas_src>
import functools
import math

import jax
import jax.numpy as jnp
from jax.experimental import pallas as pl
from jax.experimental.pallas import tpu as pltpu


def _round_up(v, m):
    return ((v + m - 1) // m) * m


def _pick_block(dim, max_block, step):
    """Largest multiple of `step` that is <= max_block and divides `dim`.

    `dim` must already be a multiple of `step` (so the loop terminates at
    `step` in the worst case). Avoids wasteful zero-padding along N / K.
    """
    b = min(_round_up(max_block, step), dim)
    b = (b // step) * step
    while dim % b != 0:
        b -= step
    return b


def _lilinear_kernel(has_out_bias, cache_trans, block_k, *refs):
    if has_out_bias:
        (x_ref, src_ref, wts_ref, bts_ref, w_ref, b_ref, o_ref,
         acc_ref, *extra) = refs
    else:
        (x_ref, src_ref, wts_ref, bts_ref, w_ref, o_ref,
         acc_ref, *extra) = refs
        b_ref = None
    trans_ref = extra[0] if cache_trans else None

    j = pl.program_id(1)
    k = pl.program_id(2)

    @pl.when(k == 0)
    def _init():
        acc_ref[...] = jnp.zeros_like(acc_ref)

    if cache_trans:
        # trans depends only on (i, k); compute it once per K tile (at j==0)
        # and reuse it for every output tile j of this batch tile.
        koff = pl.multiple_of(k * block_k, 128)

        @pl.when(j == 0)
        def _compute_trans():
            # origin_infeat contracted in full -> exact K-slice of t_src (f32).
            t_src = jnp.dot(src_ref[...], wts_ref[...],
                            preferred_element_type=jnp.float32) + bts_ref[...]
            trans = x_ref[...].astype(jnp.float32) * t_src
            trans_ref[:, pl.ds(koff, block_k)] = trans.astype(trans_ref.dtype)

        trans_mm = trans_ref[:, pl.ds(koff, block_k)]
    else:
        t_src = jnp.dot(src_ref[...], wts_ref[...],
                        preferred_element_type=jnp.float32) + bts_ref[...]
        trans_mm = (x_ref[...].astype(jnp.float32) * t_src).astype(w_ref.dtype)

    acc_ref[...] += jnp.dot(trans_mm, w_ref[...],
                            preferred_element_type=jnp.float32)

    @pl.when(k == pl.num_programs(2) - 1)
    def _finalize():
        result = acc_ref[...]
        if has_out_bias:
            result = result + b_ref[...]      # output bias added exactly once
        o_ref[...] = result.astype(o_ref.dtype)


def lilinear_forward(x, src, weight, bias, ts_weight, ts_bias, *,
                     block_b=None, block_n=None, block_k=None,
                     compute_dtype=jnp.bfloat16):
    """Pallas LILinear forward.

    x:         [B, in_features]
    src:       [B, origin_infeat]
    weight:    [out_features, in_features]      (as in the PyTorch module)
    bias:      [out_features] or None
    ts_weight: [in_features, origin_infeat]     (trans_src.weight)
    ts_bias:   [in_features]                    (trans_src.bias)
    returns:   [B, out_features] in x.dtype
    """
    x = jnp.asarray(x)
    src = jnp.asarray(src)
    weight = jnp.asarray(weight)
    ts_weight = jnp.asarray(ts_weight)
    ts_bias = jnp.asarray(ts_bias)

    B, in_features = x.shape
    Bs, origin_infeat = src.shape
    assert Bs == B
    out_features, in_f2 = weight.shape
    assert in_f2 == in_features

    out_dtype = x.dtype
    has_bias = bias is not None
    cd = compute_dtype
    cb = jnp.dtype(cd).itemsize
    ob = jnp.dtype(out_dtype).itemsize

    # ---- padded problem sizes (lane/sublane aligned, zero padding is exact) --
    K1 = _round_up(origin_infeat, 128)     # contracted in matmul 1
    K2 = _round_up(in_features, 128)       # contracted in matmul 2 (tiled)
    N = _round_up(out_features, 128)       # output, lane-dense
    Bp = _round_up(B, 8)

    # ---- tile sizes: MXU-aligned batch, lane-dense N, streamed K -------------
    if block_b is None:
        block_b = 256                      # multiple of 256 (v6e/v7x MXU rows)
    if block_n is None:
        block_n = 256
    if block_k is None:
        block_k = 512
    block_b = _pick_block(Bp, block_b, 8)
    block_n = _pick_block(N, block_n, 128)
    block_k = _pick_block(K2, block_k, 128)

    grid = (Bp // block_b, N // block_n, K2 // block_k)
    grid_b, grid_n, grid_k = grid

    # Cache `trans` in VMEM (computed at j==0, reused across j) only when it
    # actually removes redundant MXU work (grid_n > 1), when megacore can still
    # shard the batch axis (grid_b > 1), and when the scratch fits comfortably.
    trans_scratch_bytes = block_b * K2 * cb
    cache_trans = (grid_n > 1) and (grid_b > 1) and (trans_scratch_bytes <= 8 * 2**20)
    if cache_trans:
        semantics = ("parallel", "arbitrary", "arbitrary")
    else:
        semantics = ("parallel", "parallel", "arbitrary")

    # ---- host-side prep: transpose, pad, cast matmul operands to bf16 -------
    x_p = jnp.zeros((Bp, K2), cd).at[:B, :in_features].set(x.astype(cd))
    src_p = jnp.zeros((Bp, K1), cd).at[:B, :origin_infeat].set(src.astype(cd))
    wts_p = jnp.zeros((K1, K2), cd).at[:origin_infeat, :in_features].set(
        ts_weight.T.astype(cd))                                   # W_ts^T
    bts_p = jnp.zeros((1, K2), jnp.float32).at[0, :in_features].set(
        ts_bias.astype(jnp.float32))
    w_p = jnp.zeros((K2, N), cd).at[:in_features, :out_features].set(
        weight.T.astype(cd))                                      # W^T

    inputs = [x_p, src_p, wts_p, bts_p, w_p]
    in_specs = [
        pl.BlockSpec((block_b, block_k), lambda i, j, k: (i, k)),   # x
        pl.BlockSpec((block_b, K1), lambda i, j, k: (i, 0)),        # src
        pl.BlockSpec((K1, block_k), lambda i, j, k: (0, k)),        # W_ts^T
        pl.BlockSpec((1, block_k), lambda i, j, k: (0, k)),         # b_ts
        pl.BlockSpec((block_k, block_n), lambda i, j, k: (k, j)),   # W^T
    ]
    if has_bias:
        b_p = jnp.zeros((1, N), jnp.float32).at[0, :out_features].set(
            jnp.asarray(bias).astype(jnp.float32))
        inputs.append(b_p)
        in_specs.append(pl.BlockSpec((1, block_n), lambda i, j, k: (0, j)))

    out_specs = pl.BlockSpec((block_b, block_n), lambda i, j, k: (i, j))

    scratch_shapes = [pltpu.VMEM((block_b, block_n), jnp.float32)]   # f32 acc
    if cache_trans:
        scratch_shapes.append(pltpu.VMEM((block_b, K2), cd))         # cached trans

    # ---- advisory cost estimate ---------------------------------------------
    flops = (2 * B * origin_infeat * in_features
             + 2 * B * in_features * out_features)
    bytes_accessed = (x_p.size * cb + src_p.size * cb + wts_p.size * cb
                      + w_p.size * cb + bts_p.size * 4
                      + (N * 4 if has_bias else 0) + Bp * N * ob)
    cost = pl.CostEstimate(flops=flops, transcendentals=0,
                           bytes_accessed=int(bytes_accessed))

    # ---- explicit VMEM budget (double-buffered tiles + scratch) --------------
    vmem_need = 2 * (block_b * block_k * cb          # x tile
                     + block_b * K1 * cb             # src tile
                     + K1 * block_k * cb             # W_ts^T tile
                     + block_k * 4                   # b_ts tile
                     + block_k * block_n * cb        # W^T tile
                     + (block_n * 4 if has_bias else 0)
                     + block_b * block_n * ob        # out tile
                     ) + block_b * block_n * 4       # accumulator
    if cache_trans:
        vmem_need += trans_scratch_bytes
    vmem_limit = int(min(56 * 2**20, max(2 * vmem_need + 8 * 2**20, 32 * 2**20)))

    kernel = functools.partial(_lilinear_kernel, has_bias, cache_trans, block_k)

    out_p = pl.pallas_call(
        kernel,
        out_shape=jax.ShapeDtypeStruct((Bp, N), out_dtype),
        grid_spec=pltpu.PrefetchScalarGridSpec(
            num_scalar_prefetch=0,
            grid=grid,
            in_specs=in_specs,
            out_specs=out_specs,
            scratch_shapes=scratch_shapes,
        ),
        compiler_params=pltpu.CompilerParams(
            dimension_semantics=semantics,
            vmem_limit_bytes=vmem_limit,
        ),
        cost_estimate=cost,
    )(*inputs)

    return out_p[:B, :out_features]


def _reference(x, src, weight, bias, ts_weight, ts_bias, compute_dtype):
    """Pure-JAX reference with matched operand precision (f32 accumulate)."""
    cd = compute_dtype
    t_src = jnp.dot(src.astype(cd), ts_weight.T.astype(cd),
                    preferred_element_type=jnp.float32) + ts_bias.astype(jnp.float32)
    trans = x.astype(cd).astype(jnp.float32) * t_src
    out = jnp.dot(trans.astype(cd), weight.T.astype(cd),
                  preferred_element_type=jnp.float32)
    if bias is not None:
        out = out + bias.astype(jnp.float32)
    return out.astype(x.dtype)


def _kaiming_uniform(key, shape, fan_in, a=math.sqrt(5)):
    # Matches torch.nn.init.kaiming_uniform_ bound formula (via JAX PRNG).
    gain = math.sqrt(2.0 / (1.0 + a * a))
    bound = gain * math.sqrt(3.0 / fan_in)
    return jax.random.uniform(key, shape, jnp.float32, -bound, bound)


def _make_params(key, in_features, out_features, origin_infeat):
    k_w, k_b, k_tw, k_tb = jax.random.split(key, 4)
    weight = _kaiming_uniform(k_w, (out_features, in_features), fan_in=in_features)
    bound = 1.0 / math.sqrt(in_features)
    bias = jax.random.uniform(k_b, (out_features,), jnp.float32, -bound, bound)
    ts_weight = _kaiming_uniform(k_tw, (in_features, origin_infeat),
                                 fan_in=origin_infeat)
    ts_bound = 1.0 / math.sqrt(origin_infeat)
    ts_bias = jax.random.uniform(k_tb, (in_features,), jnp.float32,
                                 -ts_bound, ts_bound)
    return weight, bias, ts_weight, ts_bias


if __name__ == "__main__":
    key = jax.random.PRNGKey(0)
    k_params, k_x, k_s, k_params2, k_x2, k_s2 = jax.random.split(key, 6)

    # ---- Small shapes consistent with the module's forward (single tile) ----
    B = 8
    origin_infeat = 32
    in_features = 64
    out_features = 128

    weight, bias, ts_weight, ts_bias = _make_params(
        k_params, in_features, out_features, origin_infeat)
    x = jax.random.normal(k_x, (B, in_features), jnp.float32)
    src = jax.random.normal(k_s, (B, origin_infeat), jnp.float32)

    # Bias path.
    out = jax.block_until_ready(
        lilinear_forward(x, src, weight, bias, ts_weight, ts_bias))
    ref = _reference(x, src, weight, bias, ts_weight, ts_bias, jnp.bfloat16)
    assert out.shape == (B, out_features)
    assert jnp.allclose(out, ref, atol=2e-2, rtol=2e-2), "mismatch vs reference (bias)"

    # No-bias path (separate kernel variant; no zero-bias DMA).
    out_nb = jax.block_until_ready(
        lilinear_forward(x, src, weight, None, ts_weight, ts_bias))
    ref_nb = _reference(x, src, weight, None, ts_weight, ts_bias, jnp.bfloat16)
    assert jnp.allclose(out_nb, ref_nb, atol=2e-2, rtol=2e-2), "mismatch vs reference (no bias)"

    # Sanity vs full-f32 math (bf16 operand quantization tolerance).
    ref_f32 = (x * (src @ ts_weight.T + ts_bias)) @ weight.T + bias
    assert jnp.allclose(out, ref_f32, atol=6e-2, rtol=6e-2), "mismatch vs f32 reference"

    # ---- Larger shapes: exercises the multi-tile grid + cached-trans path ----
    B2, oi2, if2, of2 = 512, 96, 1024, 1024
    weight2, bias2, ts_weight2, ts_bias2 = _make_params(k_params2, if2, of2, oi2)
    x2 = jax.random.normal(k_x2, (B2, if2), jnp.float32)
    src2 = jax.random.normal(k_s2, (B2, oi2), jnp.float32)

    out2 = jax.block_until_ready(
        lilinear_forward(x2, src2, weight2, bias2, ts_weight2, ts_bias2))
    ref2 = _reference(x2, src2, weight2, bias2, ts_weight2, ts_bias2, jnp.bfloat16)
    assert out2.shape == (B2, of2)
    assert jnp.allclose(out2, ref2, atol=3e-2, rtol=3e-2), "mismatch vs reference (large)"

    print("KERNEL_OK")
</pallas_src>

<mosaic_0001>
module attributes {stable_mosaic.version = 11 : i64} {
  func.func @_lilinear_kernel(%arg0: i32, %arg1: i32, %arg2: i32, %arg3: memref<8x128xbf16, #tpu.memory_space<vmem>>, %arg4: memref<8x128xbf16, #tpu.memory_space<vmem>>, %arg5: memref<128x128xbf16, #tpu.memory_space<vmem>>, %arg6: memref<1x128xf32, #tpu.memory_space<vmem>>, %arg7: memref<128x128xbf16, #tpu.memory_space<vmem>>, %arg8: memref<1x128xf32, #tpu.memory_space<vmem>>, %arg9: memref<8x128xf32, #tpu.memory_space<vmem>>, %arg10: memref<8x128xf32, #tpu.memory_space<vmem>>) attributes {dimension_semantics = [#tpu.dimension_semantics<parallel>, #tpu.dimension_semantics<parallel>, #tpu.dimension_semantics<arbitrary>], iteration_bounds = array<i64: 1, 1, 1>, scalar_prefetch = 0 : i64, scratch_operands = 1 : i64, tpu.core_type = #tpu.core_type<tc>, window_params = [{transform_indices = @transform_0, window_bounds = array<i64: 8, 128>}, {transform_indices = @transform_1, window_bounds = array<i64: 8, 128>}, {transform_indices = @transform_2, window_bounds = array<i64: 128, 128>}, {transform_indices = @transform_3, window_bounds = array<i64: 1, 128>}, {transform_indices = @transform_4, window_bounds = array<i64: 128, 128>}, {transform_indices = @transform_5, window_bounds = array<i64: 1, 128>}, {transform_indices = @transform_6, window_bounds = array<i64: 8, 128>}]} {
    %c0_i32 = arith.constant 0 : i32
    %0 = arith.cmpi eq, %arg2, %c0_i32 : i32
    %1 = arith.extui %0 : i1 to i32
    %c0_i32_0 = arith.constant 0 : i32
    %2 = arith.cmpi ne, %1, %c0_i32_0 : i32
    scf.if %2 {
      %cst_17 = arith.constant 0.000000e+00 : f32
      %21 = vector.broadcast %cst_17 : f32 to vector<8x128xf32>
      %c0_18 = arith.constant 0 : index
      %c0_19 = arith.constant 0 : index
      %22 = vector.load %arg10[%c0_18, %c0_19] : memref<8x128xf32, #tpu.memory_space<vmem>>, vector<8x128xf32>
      tpu.vector_store %arg10[%c0_18, %c0_19], %21 {strides = array<i32>} : memref<8x128xf32, #tpu.memory_space<vmem>>, vector<8x128xf32>,
    } else {
    }
    %c0 = arith.constant 0 : index
    %c0_1 = arith.constant 0 : index
    %3 = vector.load %arg4[%c0, %c0_1] : memref<8x128xbf16, #tpu.memory_space<vmem>>, vector<8x128xbf16>
    %c0_2 = arith.constant 0 : index
    %c0_3 = arith.constant 0 : index
    %4 = vector.load %arg5[%c0_2, %c0_3] : memref<128x128xbf16, #tpu.memory_space<vmem>>, vector<128x128xbf16>
    %cst = arith.constant dense<0.000000e+00> : vector<8x128xf32>
    %5 = tpu.matmul %3, %4, %cst {dimension_numbers = #tpu.dot_dimension_numbers<[1], [0], [0], [1], [0, 0, 1, 1], [], []>} : vector<8x128xbf16>, vector<128x128xbf16>, vector<8x128xf32> -> vector<8x128xf32>
    %c0_4 = arith.constant 0 : index
    %c0_5 = arith.constant 0 : index
    %6 = vector.load %arg6[%c0_4, %c0_5] : memref<1x128xf32, #tpu.memory_space<vmem>>, vector<1x128xf32>
    %7 = vector.broadcast %6 : vector<1x128xf32> to vector<8x128xf32>
    %8 = arith.addf %5, %7 : vector<8x128xf32>
    %c0_6 = arith.constant 0 : index
    %c0_7 = arith.constant 0 : index
    %9 = vector.load %arg3[%c0_6, %c0_7] : memref<8x128xbf16, #tpu.memory_space<vmem>>, vector<8x128xbf16>
    %10 = arith.extf %9 : vector<8x128xbf16> to vector<8x128xf32>
    %11 = arith.mulf %10, %8 : vector<8x128xf32>
    %12 = arith.truncf %11 : vector<8x128xf32> to vector<8x128xbf16>
    %c0_8 = arith.constant 0 : index
    %c0_9 = arith.constant 0 : index
    %13 = vector.load %arg10[%c0_8, %c0_9] : memref<8x128xf32, #tpu.memory_space<vmem>>, vector<8x128xf32>
    %c0_10 = arith.constant 0 : index
    %c0_11 = arith.constant 0 : index
    %14 = vector.load %arg7[%c0_10, %c0_11] : memref<128x128xbf16, #tpu.memory_space<vmem>>, vector<128x128xbf16>
    %cst_12 = arith.constant dense<0.000000e+00> : vector<8x128xf32>
    %15 = tpu.matmul %12, %14, %cst_12 {dimension_numbers = #tpu.dot_dimension_numbers<[1], [0], [0], [1], [0, 0, 1, 1], [], []>} : vector<8x128xbf16>, vector<128x128xbf16>, vector<8x128xf32> -> vector<8x128xf32>
    %16 = arith.addf %13, %15 : vector<8x128xf32>
    %c0_13 = arith.constant 0 : index
    %c0_14 = arith.constant 0 : index
    %17 = vector.load %arg10[%c0_13, %c0_14] : memref<8x128xf32, #tpu.memory_space<vmem>>, vector<8x128xf32>
    tpu.vector_store %arg10[%c0_13, %c0_14], %16 {strides = array<i32>} : memref<8x128xf32, #tpu.memory_space<vmem>>, vector<8x128xf32>,
    %c0_i32_15 = arith.constant 0 : i32
    %18 = arith.cmpi eq, %arg2, %c0_i32_15 : i32
    %19 = arith.extui %18 : i1 to i32
    %c0_i32_16 = arith.constant 0 : i32
    %20 = arith.cmpi ne, %19, %c0_i32_16 : i32
    scf.if %20 {
      %c0_17 = arith.constant 0 : index
      %c0_18 = arith.constant 0 : index
      %21 = vector.load %arg10[%c0_17, %c0_18] : memref<8x128xf32, #tpu.memory_space<vmem>>, vector<8x128xf32>
      %c0_19 = arith.constant 0 : index
      %c0_20 = arith.constant 0 : index
      %22 = vector.load %arg8[%c0_19, %c0_20] : memref<1x128xf32, #tpu.memory_space<vmem>>, vector<1x128xf32>
      %23 = vector.broadcast %22 : vector<1x128xf32> to vector<8x128xf32>
      %24 = arith.addf %21, %23 : vector<8x128xf32>
      %c0_21 = arith.constant 0 : index
      %c0_22 = arith.constant 0 : index
      %25 = vector.load %arg9[%c0_21, %c0_22] : memref<8x128xf32, #tpu.memory_space<vmem>>, vector<8x128xf32>
      tpu.vector_store %arg9[%c0_21, %c0_22], %24 {strides = array<i32>} : memref<8x128xf32, #tpu.memory_space<vmem>>, vector<8x128xf32>,
    } else {
    }
    return
  }
  func.func @transform_0(%arg0: i32, %arg1: i32, %arg2: i32) -> (i32, i32) {
    %c0_i32 = arith.constant 0 : i32
    return %arg0, %arg2 : i32, i32
  }
  func.func @transform_1(%arg0: i32, %arg1: i32, %arg2: i32) -> (i32, i32) {
    %c0_i32 = arith.constant 0 : i32
    %c0_i32_0 = arith.constant 0 : i32
    return %arg0, %c0_i32 : i32, i32
  }
  func.func @transform_2(%arg0: i32, %arg1: i32, %arg2: i32) -> (i32, i32) {
    %c0_i32 = arith.constant 0 : i32
    %c0_i32_0 = arith.constant 0 : i32
    return %c0_i32, %arg2 : i32, i32
  }
  func.func @transform_3(%arg0: i32, %arg1: i32, %arg2: i32) -> (i32, i32) {
    %c0_i32 = arith.constant 0 : i32
    %c0_i32_0 = arith.constant 0 : i32
    return %c0_i32, %arg2 : i32, i32
  }
  func.func @transform_4(%arg0: i32, %arg1: i32, %arg2: i32) -> (i32, i32) {
    %c0_i32 = arith.constant 0 : i32
    return %arg2, %arg1 : i32, i32
  }
  func.func @transform_5(%arg0: i32, %arg1: i32, %arg2: i32) -> (i32, i32) {
    %c0_i32 = arith.constant 0 : i32
    %c0_i32_0 = arith.constant 0 : i32
    return %c0_i32, %arg1 : i32, i32
  }
  func.func @transform_6(%arg0: i32, %arg1: i32, %arg2: i32) -> (i32, i32) {
    %c0_i32 = arith.constant 0 : i32
    return %arg0, %arg1 : i32, i32
  }
}

</mosaic_0001>

<llo_original>
// kernel: tpu_custom_call.1
$region0: #{tpu_custom_call.1}
  #allocation0 [shape = 'u32[]', space=smem, size = 0x4, offset = 0x4, fixed_abs, tag = 'smem constant byte address 0x4 - core index']
  #allocation1 [shape = 'u32[144,128]{1,0:T(1,128)}', space=vmem, size = 0x12000, scoped, tag = 'internal scratch']
  #allocation2 [shape = 'f32[8,128]{1,0:T(8,128)}', space=vmem, size = 0x1000, scoped, tag = 'scratch operand']
  %s0 = inlined_call_operand.hbm [shape: bf16[8,128], index: 0, kind: input, shape index: {}]
  %s1 = inlined_call_operand.hbm [shape: bf16[8,128], index: 1, kind: input, shape index: {}]
  %s2 = inlined_call_operand.hbm [shape: bf16[128,128], index: 2, kind: input, shape index: {}]
  %s3 = inlined_call_operand.vmem [shape: f32[1,128], index: 3, kind: input, shape index: {}]
  %s4 = inlined_call_operand.hbm [shape: bf16[128,128], index: 4, kind: input, shape index: {}]
  %s5 = inlined_call_operand.vmem [shape: f32[1,128], index: 5, kind: input, shape index: {}]
  %s6 = inlined_call_operand.hbm [shape: f32[8,128], index: 6, kind: output, shape index: {}]
  %s7 = sld [smem:[#allocation0]]
  $region58: #{tpu_custom_call.1} parent=0
    _
  %s9 = ssub.s32 1, %s7
  %s10 = scalar_select 0, %s9, %s7
  $region1: #{tpu_custom_call.1} parent=0
    #allocation3 [shape = 'u8[2048]{0}', space=vmem, size = 0x800, scoped, tag = 'input window, operand 0, single buffered']
    #allocation4 [shape = 's32[1]{0}', space=sflag, size = 0x4, scoped, tag = 'scoped memory for tpu_custom_call.1']
    #allocation5 [shape = 's32[1]{0}', space=sflag, size = 0x4, scoped, tag = 'scoped memory for tpu_custom_call.1']
    #allocation6 [shape = 'u8[2048]{0}', space=vmem, size = 0x800, scoped, tag = 'input window, operand 1, single buffered']
    #allocation7 [shape = 's32[1]{0}', space=sflag, size = 0x4, scoped, tag = 'scoped memory for tpu_custom_call.1']
    #allocation8 [shape = 'u8[32768]{0}', space=vmem, size = 0x8000, scoped, tag = 'input window, operand 2, single buffered']
    #allocation9 [shape = 'u8[32768]{0}', space=vmem, size = 0x8000, scoped, tag = 'input window, operand 4, single buffered']
    #allocation10 [shape = 's32[1]{0}', space=sflag, size = 0x4, scoped, tag = 'scoped memory for tpu_custom_call.1']
    #allocation11 [shape = 'u8[4096]{0}', space=vmem, size = 0x1000, scoped, tag = 'output window, operand 0, single buffered']
    %11 = vsyncpa [#allocation4], 0
    %12 = vsyncpa [#allocation7], 0
    %13 = vsyncpa [#allocation10], 0
    %14 = vsyncpa [#allocation5], 0
    // Predicated region
    $region2: #{tpu_custom_call.1} parent=1 // pred_check
      _
    $region3: #{tpu_custom_call.1} parent=1 // pred_check_branch
      %16 = sbr.rel (0) target = $region5
    $region4: #{tpu_custom_call.1} parent=1 // pred_region
      %s18 = ssub.s32 64, 64
      %19 = vsyncadd [#allocation4], %s18
      %s21 = sshll.u32 [#allocation3], 4
      %s22 = int_to_ptr.vmem [resolvable:$true] %s21
      %24 = dma.hbm_to_vmem [thread:$0]  %s0, 64, %s22, [#allocation4]
    $region5: #{tpu_custom_call.1} parent=1 // pred_fallthru
      _
    // Predicated region
    $region6: #{tpu_custom_call.1} parent=1 // pred_check
      _
    $region7: #{tpu_custom_call.1} parent=1 // pred_check_branch
      %26 = sbr.rel (0) target = $region9
    $region8: #{tpu_custom_call.1} parent=1 // pred_region
      %s28 = ssub.s32 64, 64
      %29 = vsyncadd [#allocation7], %s28
      %s31 = sshll.u32 [#allocation6], 4
      %s32 = int_to_ptr.vmem [resolvable:$true] %s31
      %34 = dma.hbm_to_vmem [thread:$0]  %s1, 64, %s32, [#allocation7]
    $region9: #{tpu_custom_call.1} parent=1 // pred_fallthru
      _
    // Predicated region
    $region10: #{tpu_custom_call.1} parent=1 // pred_check
      _
    $region11: #{tpu_custom_call.1} parent=1 // pred_check_branch
      %36 = sbr.rel (0) target = $region13
    $region12: #{tpu_custom_call.1} parent=1 // pred_region
      %s38 = ssub.s32 1024, 1024
      %39 = vsyncadd [#allocation7], %s38
      %s40 = sshll.u32 [#allocation8], 4
      %s41 = int_to_ptr.vmem [resolvable:$true] %s40
      %46 = dma.hbm_to_vmem [thread:$0]  %s2, 1024, %s41, [#allocation7], 64, 64, 4
    $region13: #{tpu_custom_call.1} parent=1 // pred_fallthru
      _
    // Predicated region
    $region14: #{tpu_custom_call.1} parent=1 // pred_check
      _
    $region15: #{tpu_custom_call.1} parent=1 // pred_check_branch
      %48 = sbr.rel (0) target = $region17
    $region16: #{tpu_custom_call.1} parent=1 // pred_region
      _
    $region17: #{tpu_custom_call.1} parent=1 // pred_fallthru
      _
    // Predicated region
    $region18: #{tpu_custom_call.1} parent=1 // pred_check
      _
    $region19: #{tpu_custom_call.1} parent=1 // pred_check_branch
      %50 = sbr.rel (0) target = $region21
    $region20: #{tpu_custom_call.1} parent=1 // pred_region
      %s52 = ssub.s32 1024, 1024
      %53 = vsyncadd [#allocation10], %s52
      %s54 = sshll.u32 [#allocation9], 4
      %s55 = int_to_ptr.vmem [resolvable:$true] %s54
      %60 = dma.hbm_to_vmem [thread:$0]  %s4, 1024, %s55, [#allocation10], 64, 64, 4
    $region21: #{tpu_custom_call.1} parent=1 // pred_fallthru
      _
    // Predicated region
    $region22: #{tpu_custom_call.1} parent=1 // pred_check
      _
    $region23: #{tpu_custom_call.1} parent=1 // pred_check_branch
      %62 = sbr.rel (0) target = $region25
    $region24: #{tpu_custom_call.1} parent=1 // pred_region
      _
    $region25: #{tpu_custom_call.1} parent=1 // pred_fallthru
      _
    // Predicated region
    $region26: #{tpu_custom_call.1} parent=1 // pred_check
      _
    $region27: #{tpu_custom_call.1} parent=1 // pred_check_branch
      %64 = sbr.rel (0) target = $region29
    $region28: #{tpu_custom_call.1} parent=1 // pred_region
      %65 = dma.done [#allocation4], 64
    $region29: #{tpu_custom_call.1} parent=1 // pred_fallthru
      _
    // Predicated region
    $region30: #{tpu_custom_call.1} parent=1 // pred_check
      _
    $region31: #{tpu_custom_call.1} parent=1 // pred_check_branch
      %67 = sbr.rel (0) target = $region33
    $region32: #{tpu_custom_call.1} parent=1 // pred_region
      %68 = dma.done [#allocation7], 64
    $region33: #{tpu_custom_call.1} parent=1 // pred_fallthru
      _
    // Predicated region
    $region34: #{tpu_custom_call.1} parent=1 // pred_check
      _
    $region35: #{tpu_custom_call.1} parent=1 // pred_check_branch
      %70 = sbr.rel (0) target = $region37
    $region36: #{tpu_custom_call.1} parent=1 // pred_region
      %71 = dma.done [#allocation7], 1024
    $region37: #{tpu_custom_call.1} parent=1 // pred_fallthru
      _
    // Predicated region
    $region38: #{tpu_custom_call.1} parent=1 // pred_check
      _
    $region39: #{tpu_custom_call.1} parent=1 // pred_check_branch
      %73 = sbr.rel (0) target = $region41
    $region40: #{tpu_custom_call.1} parent=1 // pred_region
      %74 = dma.done [#allocation10], 1024
    $region41: #{tpu_custom_call.1} parent=1 // pred_fallthru
      _
    %p76 = scmp.eq.s32.totalorder 0, 0
    // Predicated region
    $region42: #{tpu_custom_call.1} parent=1 // pred_check
      %p77 = pneg %p76
    $region43: #{tpu_custom_call.1} parent=1 // pred_check_branch
      %79 = sbr.rel (%p77) target = $region45
    $region44: #{tpu_custom_call.1} parent=1 // pred_region
      %80 = vst [vmem:[#allocation2] sm:$0xff] 0.0
    $region45: #{tpu_custom_call.1} parent=1 // pred_fallthru
      _
    %v81 = vld [vmem:[#allocation6] sm:$0xf]
    %v82 = vld [vmem:[#allocation8] sm:$0xf]
    %v83 = vld [vmem:[#allocation8 + $0x4] sm:$0xf]
    %v84 = vld [vmem:[#allocation8 + $0x8] sm:$0xf]
    %v85 = vld [vmem:[#allocation8 + $0xc] sm:$0xf]
    %v86 = vld [vmem:[#allocation8 + $0x10] sm:$0xf]
    %v87 = vld [vmem:[#allocation8 + $0x14] sm:$0xf]
    %v88 = vld [vmem:[#allocation8 + $0x18] sm:$0xf]
    %v89 = vld [vmem:[#allocation8 + $0x1c] sm:$0xf]
    %v90 = vld [vmem:[#allocation8 + $0x20] sm:$0xf]
    %v91 = vld [vmem:[#allocation8 + $0x24] sm:$0xf]
    %v92 = vld [vmem:[#allocation8 + $0x28] sm:$0xf]
    %v93 = vld [vmem:[#allocation8 + $0x2c] sm:$0xf]
    %v94 = vld [vmem:[#allocation8 + $0x30] sm:$0xf]
    %v95 = vld [vmem:[#allocation8 + $0x34] sm:$0xf]
    %v96 = vld [vmem:[#allocation8 + $0x38] sm:$0xf]
    %v97 = vld [vmem:[#allocation8 + $0x3c] sm:$0xf]
    %v98 = vld [vmem:[%s3] sm:$0x1]
    %v100 = vlaneseq
    %v101 = vshrl.u32 %v100, 7
    %v102 = vsub.s32 0, %v101
    %v103 = vrot.slane %v98, %v102
    %v121 = vunpack.c.l.b16 %v82
    %v122 = vunpack.c.l.b16 %v83
    %v123 = vunpack.c.l.b16 %v84
    %v124 = vunpack.c.l.b16 %v85
    %v125 = vunpack.c.l.b16 %v86
    %v126 = vunpack.c.l.b16 %v87
    %v127 = vunpack.c.l.b16 %v88
    %v128 = vunpack.c.l.b16 %v89
    %v129 = vunpack.c.l.b16 %v90
    %v130 = vunpack.c.l.b16 %v91
    %v131 = vunpack.c.l.b16 %v92
    %v132 = vunpack.c.l.b16 %v93
    %v133 = vunpack.c.l.b16 %v94
    %v134 = vunpack.c.l.b16 %v95
    %v135 = vunpack.c.l.b16 %v96
    %v136 = vunpack.c.l.b16 %v97
    %v137 = vpack.c.b16 %v122, %v121
    %v138 = vpack.c.b16 %v124, %v123
    %v139 = vpack.c.b16 %v126, %v125
    %v140 = vpack.c.b16 %v128, %v127
    %v141 = vpack.c.b16 %v130, %v129
    %v142 = vpack.c.b16 %v132, %v131
    %v143 = vpack.c.b16 %v134, %v133
    %v144 = vpack.c.b16 %v136, %v135
    %153 = vmatprep.subr.bf16.mxu0 0
    %154 = vmatpush1.bf16.msra.mxu0 %v137
    %155 = vmatprep.subr.bf16.mxu0 0
    %156 = vmatpush1.bf16.msra.mxu0 %v138
    %157 = vmatprep.subr.bf16.mxu0 0
    %158 = vmatpush1.bf16.msra.mxu0 %v139
    %159 = vmatprep.subr.bf16.mxu0 0
    %160 = vmatpush1.bf16.msra.mxu0 %v140
    %161 = vmatprep.subr.bf16.mxu0 0
    %162 = vmatpush1.bf16.msra.mxu0 %v141
    %163 = vmatprep.subr.bf16.mxu0 0
    %164 = vmatpush1.bf16.msra.mxu0 %v142
    %165 = vmatprep.subr.bf16.mxu0 0
    %166 = vmatpush1.bf16.msra.mxu0 %v143
    %167 = vmatprep.subr.bf16.mxu0 0
    %168 = vmatpush1.bf16.msra.mxu0 %v144
    %169 = vmatprep.subr.bf16.mxu0 0
    %170 = vmatpush1.bf16.msra.mxu0 0
    %171 = vmatprep.subr.bf16.mxu0 0
    %172 = vmatpush1.bf16.msra.mxu0 0
    %173 = vmatprep.subr.bf16.mxu0 0
    %174 = vmatpush1.bf16.msra.mxu0 0
    %175 = vmatprep.subr.bf16.mxu0 0
    %176 = vmatpush1.bf16.msra.mxu0 0
    %177 = vmatprep.subr.bf16.mxu0 0
    %178 = vmatpush1.bf16.msra.mxu0 0
    %179 = vmatprep.subr.bf16.mxu0 0
    %180 = vmatpush1.bf16.msra.mxu0 0
    %181 = vmatprep.subr.bf16.mxu0 0
    %182 = vmatpush1.bf16.msra.mxu0 0
    %183 = vmatprep.subr.bf16.mxu0 0
    %184 = vmatpush1.bf16.msra.mxu0 0
    %185 = vmatprep.mubr.bf16.mxu0 0
    %186 = vmatmul.mubr.bf16.gmra.mrb[0].mxu0 %v81
    %v187 = vpop.f32.mrb[0].mxu0
    %v188 = vadd.f32 %v103, %v187
    %v189 = vpop.f32.mrb[0].mxu0
    %v190 = vpop.f32.mrb[0].mxu0
    %v191 = vpop.f32.mrb[0].mxu0
    %192 = vdwg.mxu0
    %v193 = vld [vmem:[#allocation3] sm:$0xf]
    %v194 = vunpack.c.l.bf16 %v193
    %v195 = vmul.f32 %v194, %v188
    %v196 = vpack.c.bf16 %v195, %v195
    %v197 = vld [vmem:[#allocation2] sm:$0xff]
    %v198 = vld [vmem:[#allocation9] sm:$0xf]
    %v199 = vld [vmem:[#allocation9 + $0x4] sm:$0xf]
    %v200 = vld [vmem:[#allocation9 + $0x8] sm:$0xf]
    %v201 = vld [vmem:[#allocation9 + $0xc] sm:$0xf]
    %v202 = vld [vmem:[#allocation9 + $0x10] sm:$0xf]
    %v203 = vld [vmem:[#allocation9 + $0x14] sm:$0xf]
    %v204 = vld [vmem:[#allocation9 + $0x18] sm:$0xf]
    %v205 = vld [vmem:[#allocation9 + $0x1c] sm:$0xf]
    %v206 = vld [vmem:[#allocation9 + $0x20] sm:$0xf]
    %v207 = vld [vmem:[#allocation9 + $0x24] sm:$0xf]
    %v208 = vld [vmem:[#allocation9 + $0x28] sm:$0xf]
    %v209 = vld [vmem:[#allocation9 + $0x2c] sm:$0xf]
    %v210 = vld [vmem:[#allocation9 + $0x30] sm:$0xf]
    %v211 = vld [vmem:[#allocation9 + $0x34] sm:$0xf]
    %v212 = vld [vmem:[#allocation9 + $0x38] sm:$0xf]
    %v213 = vld [vmem:[#allocation9 + $0x3c] sm:$0xf]
    %v230 = vunpack.c.l.b16 %v198
    %v231 = vunpack.c.l.b16 %v199
    %v232 = vunpack.c.l.b16 %v200
    %v233 = vunpack.c.l.b16 %v201
    %v234 = vunpack.c.l.b16 %v202
    %v235 = vunpack.c.l.b16 %v203
    %v236 = vunpack.c.l.b16 %v204
    %v237 = vunpack.c.l.b16 %v205
    %v238 = vunpack.c.l.b16 %v206
    %v239 = vunpack.c.l.b16 %v207
    %v240 = vunpack.c.l.b16 %v208
    %v241 = vunpack.c.l.b16 %v209
    %v242 = vunpack.c.l.b16 %v210
    %v243 = vunpack.c.l.b16 %v211
    %v244 = vunpack.c.l.b16 %v212
    %v245 = vunpack.c.l.b16 %v213
    %v246 = vpack.c.b16 %v231, %v230
    %v247 = vpack.c.b16 %v233, %v232
    %v248 = vpack.c.b16 %v235, %v234
    %v249 = vpack.c.b16 %v237, %v236
    %v250 = vpack.c.b16 %v239, %v238
    %v251 = vpack.c.b16 %v241, %v240
    %v252 = vpack.c.b16 %v243, %v242
    %v253 = vpack.c.b16 %v245, %v244
    %262 = vmatprep.subr.bf16.mxu0 0
    %263 = vmatpush1.bf16.msra.mxu0 %v246
    %264 = vmatprep.subr.bf16.mxu0 0
    %265 = vmatpush1.bf16.msra.mxu0 %v247
    %266 = vmatprep.subr.bf16.mxu0 0
    %267 = vmatpush1.bf16.msra.mxu0 %v248
    %268 = vmatprep.subr.bf16.mxu0 0
    %269 = vmatpush1.bf16.msra.mxu0 %v249
    %270 = vmatprep.subr.bf16.mxu0 0
    %271 = vmatpush1.bf16.msra.mxu0 %v250
    %272 = vmatprep.subr.bf16.mxu0 0
    %273 = vmatpush1.bf16.msra.mxu0 %v251
    %274 = vmatprep.subr.bf16.mxu0 0
    %275 = vmatpush1.bf16.msra.mxu0 %v252
    %276 = vmatprep.subr.bf16.mxu0 0
    %277 = vmatpush1.bf16.msra.mxu0 %v253
    %278 = vmatprep.subr.bf16.mxu0 0
    %279 = vmatpush1.bf16.msra.mxu0 0
    %280 = vmatprep.subr.bf16.mxu0 0
    %281 = vmatpush1.bf16.msra.mxu0 0
    %282 = vmatprep.subr.bf16.mxu0 0
    %283 = vmatpush1.bf16.msra.mxu0 0
    %284 = vmatprep.subr.bf16.mxu0 0
    %285 = vmatpush1.bf16.msra.mxu0 0
    %286 = vmatprep.subr.bf16.mxu0 0
    %287 = vmatpush1.bf16.msra.mxu0 0
    %288 = vmatprep.subr.bf16.mxu0 0
    %289 = vmatpush1.bf16.msra.mxu0 0
    %290 = vmatprep.subr.bf16.mxu0 0
    %291 = vmatpush1.bf16.msra.mxu0 0
    %292 = vmatprep.subr.bf16.mxu0 0
    %293 = vmatpush1.bf16.msra.mxu0 0
    %294 = vmatprep.mubr.bf16.mxu0 0
    %295 = vmatmul.mubr.bf16.gmra.mrb[0].mxu0 %v196
    %v296 = vpop.f32.mrb[0].mxu0
    %v297 = vadd.f32 0.0, %v296
    %v298 = vpop.f32.mrb[0].mxu0
    %v299 = vpop.f32.mrb[0].mxu0
    %v300 = vpop.f32.mrb[0].mxu0
    %301 = vdwg.mxu0
    %v302 = vadd.f32 %v197, %v297
    %303 = vst [vmem:[#allocation2] sm:$0xff] %v302
    // Predicated region
    $region46: #{tpu_custom_call.1} parent=1 // pred_check
      %p304 = pneg %p76
    $region47: #{tpu_custom_call.1} parent=1 // pred_check_branch
      %306 = sbr.rel (%p304) target = $region49
    $region48: #{tpu_custom_call.1} parent=1 // pred_region
      %v307 = vld [vmem:[#allocation2] sm:$0xff]
      %v308 = vld [vmem:[%s5] sm:$0x1]
      %v310 = vlaneseq
      %v311 = vshrl.u32 %v310, 7
      %v312 = vsub.s32 0, %v311
      %v313 = vrot.slane %v308, %v312
      %v315 = vadd.f32 %v307, %v313
      %316 = vst [vmem:[#allocation11] sm:$0xff] %v315
    $region49: #{tpu_custom_call.1} parent=1 // pred_fallthru
      _
    // Predicated region
    $region50: #{tpu_custom_call.1} parent=1 // pred_check
      _
    $region51: #{tpu_custom_call.1} parent=1 // pred_check_branch
      %318 = sbr.rel (0) target = $region53
    $region52: #{tpu_custom_call.1} parent=1 // pred_region
      %s320 = ssub.s32 128, 128
      %321 = vsyncadd [#allocation5], %s320
      %s323 = sshll.u32 [#allocation11], 4
      %s324 = int_to_ptr.vmem [resolvable:$true] %s323
      %326 = dma.vmem_to_hbm [thread:$0]  %s324, 128, %s6, [#allocation5]
    $region53: #{tpu_custom_call.1} parent=1 // pred_fallthru
      _
    // Predicated region
    $region54: #{tpu_custom_call.1} parent=1 // pred_check
      _
    $region55: #{tpu_custom_call.1} parent=1 // pred_check_branch
      %328 = sbr.rel (0) target = $region57
    $region56: #{tpu_custom_call.1} parent=1 // pred_region
      %329 = dma.done [#allocation5], 128
    $region57: #{tpu_custom_call.1} parent=1 // pred_fallthru
      _
    %330 = vsyncpa [#allocation4], 1
    %331 = vsyncpa [#allocation7], 1
    %332 = vsyncpa [#allocation10], 1
    %333 = vsyncpa [#allocation5], 1

</llo_original>
